<compile_context>
chip_gen: v6e
topology: v6e:2x2x1
jax: 0.10.0
libtpu: 0.0.40
codegen_flags: <defaults>
</compile_context>

<pallas_src>
import functools

import numpy as np

import jax
import jax.numpy as jnp
from jax.experimental import pallas as pl
from jax.experimental.pallas import tpu as pltpu

BN_EPS = 1e-5
LANE = 128
D_NON_PROJ = 768
D_PROJ = 512


def _round_up(x, m):
    return ((x + m - 1) // m) * m


def _coop_head_kernel(
    x_np_ref,    # [B, 768] f32  CLS features (non-projected)
    x_p_ref,     # [B, 512] f32  CLS features (projected)
    bn_ref,      # [4, 768] f32  packed (gamma_np, beta_np, gamma_p|pad, beta_p|pad)
    w_hbm_ref,   # [768, 2*Cp] f32  combined pre-transposed classifier weights (HBM)
    out_ref,     # [2B, 2*Cp] f32  fused logits output
    w_vmem,      # VMEM scratch [768, 2*Cp] f32 (weight landing buffer)
    dma_sem,     # DMA semaphore
):
    """Fused training-mode BatchNorm1d(768/512) + bias-free Linear for both
    branches.  The weight HBM->VMEM copy overlaps the BN math, and both
    classifiers are evaluated with a single M=2B MXU pass."""
    b = x_np_ref.shape[0]
    d_np = x_np_ref.shape[1]
    d_p = x_p_ref.shape[1]

    # 1) Kick off the bulk classifier-weight DMA immediately; it proceeds in
    #    the background while the (independent) BN math runs on the VPU.
    w_copy = pltpu.make_async_copy(w_hbm_ref, w_vmem, dma_sem)
    w_copy.start()

    # 2) Training-mode BN: biased batch statistics over the batch axis, f32.
    def batchnorm(x, gamma, beta):
        mean = jnp.mean(x, axis=0, keepdims=True)
        xc = x - mean
        var = jnp.mean(xc * xc, axis=0, keepdims=True)
        inv_std = jax.lax.rsqrt(var + BN_EPS)
        return xc * inv_std * gamma + beta

    feat_np = batchnorm(x_np_ref[...].astype(jnp.float32),
                        bn_ref[0:1, :], bn_ref[1:2, :])            # [B, 768]
    feat_p = batchnorm(x_p_ref[...].astype(jnp.float32),
                       bn_ref[2:3, 0:d_p], bn_ref[3:4, 0:d_p])     # [B, 512]

    # 3) Build one LHS [2B, 768]: rows 0:B = non-proj features, rows B:2B =
    #    proj features zero-padded in K (the matching RHS rows are also zero,
    #    so the cross-block products that land in the unused output quadrants
    #    are harmless and simply discarded by the wrapper).
    feat_p_pad = jnp.concatenate(
        [feat_p, jnp.zeros((b, d_np - d_p), jnp.float32)], axis=1)  # [B, 768]
    lhs = jnp.concatenate([feat_np, feat_p_pad], axis=0)            # [2B, 768]

    # 4) Wait for the weights, then one f32 MXU pass for both classifiers.
    w_copy.wait()
    out_ref[...] = jnp.dot(lhs, w_vmem[...],
                           preferred_element_type=jnp.float32)


def coop_head(x_np, x_p, bn_pack, w_all):
    """x_np: [B, 768] f32, x_p: [B, 512] f32, bn_pack: [4, 768] f32,
    w_all: [768, 2*Cp] f32 (combined pre-transposed, lane-padded weights).
    Returns fused padded logits [2B, 2*Cp] f32 (rows 0:B x cols 0:Cp = non-proj
    scores, rows B:2B x cols Cp:2Cp = proj scores)."""
    B, d_np = x_np.shape
    c2 = w_all.shape[1]

    return pl.pallas_call(
        _coop_head_kernel,
        out_shape=jax.ShapeDtypeStruct((2 * B, c2), jnp.float32),
        in_specs=[
            pl.BlockSpec(memory_space=pltpu.MemorySpace.VMEM),
            pl.BlockSpec(memory_space=pltpu.MemorySpace.VMEM),
            pl.BlockSpec(memory_space=pltpu.MemorySpace.VMEM),
            pl.BlockSpec(memory_space=pl.ANY),     # weights stay in HBM; manual DMA
        ],
        out_specs=pl.BlockSpec(memory_space=pltpu.MemorySpace.VMEM),
        scratch_shapes=[
            pltpu.VMEM((d_np, c2), jnp.float32),   # weight landing buffer
            pltpu.SemaphoreType.DMA(()),
        ],
        # No grid: everything (< 1.5 MiB at C=128) fits in VMEM as one flat body.
    )(x_np.astype(jnp.float32), x_p.astype(jnp.float32), bn_pack, w_all)


def init_params(key, num_classes, d_non_proj=D_NON_PROJ, d_proj=D_PROJ):
    """Deterministic parameter init mirroring the PyTorch module __init__,
    plus kernel-ready packed/padded layouts built once (not per forward)."""
    k1, k2 = jax.random.split(key)
    # weights_init_classifier: N(0, std=0.001), no bias (torch layout [C, D]).
    w_np = 0.001 * jax.random.normal(k1, (num_classes, d_non_proj), jnp.float32)
    w_p = 0.001 * jax.random.normal(k2, (num_classes, d_proj), jnp.float32)

    c_pad = _round_up(num_classes, LANE)
    # Combined, pre-transposed, lane-padded RHS [768, 2*c_pad] f32:
    #   cols [0, c_pad)       = w_np^T           (rows 0:768)
    #   cols [c_pad, 2*c_pad) = w_p^T            (rows 0:512; rows 512:768 zero)
    w_all = jnp.zeros((d_non_proj, 2 * c_pad), jnp.float32)
    w_all = w_all.at[:, :num_classes].set(jnp.transpose(w_np))
    w_all = w_all.at[:d_proj, c_pad:c_pad + num_classes].set(jnp.transpose(w_p))

    # weights_init_kaiming on BatchNorm: weight=1, bias=0.  Packed [4, 768]:
    # rows = (gamma_np, beta_np, gamma_p (padded), beta_p (padded)).
    bn_pack = jnp.zeros((4, d_non_proj), jnp.float32)
    bn_pack = bn_pack.at[0, :].set(1.0)
    bn_pack = bn_pack.at[2, :d_proj].set(1.0)

    return {
        "bn_pack": bn_pack,
        # Reference (torch-layout) weights, kept for parity checks / export.
        "cls_np_w": w_np,
        "cls_p_w": w_p,
        # Kernel-ready combined weight (transposed, lane-padded, f32).
        "w_all": w_all,
    }


def custom_clip_coop_forward(
    params,
    image_features_last,      # [B, L, 768]  (encoder output, pre-computed)
    image_features_non_proj,  # [B, L, 768]
    image_features,           # [B, L, 512]
    training=True,
):
    # CLS token (index 0 along the token axis), as in the PyTorch forward.
    feats_last_cls = image_features_last[:, 0]
    feats_non_proj_cls = image_features_non_proj[:, 0]
    feats_cls = image_features[:, 0]

    if not training:
        # Eval path: raw CLS features concatenated (matches the PyTorch module,
        # which bypasses the bottleneck BN at inference).
        return jnp.concatenate((feats_non_proj_cls, feats_cls), axis=1)

    B = feats_cls.shape[0]
    num_classes = params["cls_np_w"].shape[0]
    c_pad = params["w_all"].shape[1] // 2

    scores = coop_head(feats_non_proj_cls, feats_cls,
                       params["bn_pack"], params["w_all"])
    cls_score = scores[:B, :num_classes]
    cls_score_proj = scores[B:, c_pad:c_pad + num_classes]

    return (
        [cls_score, cls_score_proj],
        [feats_last_cls, feats_non_proj_cls, feats_cls],
        feats_cls,
    )


if __name__ == "__main__":
    key = jax.random.PRNGKey(0)
    k_params, k_last, k_np, k_p = jax.random.split(key, 4)

    B, L = 8, 4            # batch, tokens (only token 0 is used by the head)
    NUM_CLASSES = 128

    params = init_params(k_params, NUM_CLASSES)

    # Synthetic CLIP image-encoder outputs (see TODO(synk) above).
    image_features_last = jax.random.normal(k_last, (B, L, D_NON_PROJ), jnp.float32)
    image_features_non_proj = jax.random.normal(k_np, (B, L, D_NON_PROJ), jnp.float32)
    image_features = jax.random.normal(k_p, (B, L, D_PROJ), jnp.float32)

    fwd = jax.jit(functools.partial(custom_clip_coop_forward, training=True))
    scores, feats_list, feats = fwd(
        params, image_features_last, image_features_non_proj, image_features
    )
    jax.block_until_ready((scores, feats_list, feats))

    # Eval path (plain concat of CLS features).
    eval_out = custom_clip_coop_forward(
        params, image_features_last, image_features_non_proj, image_features,
        training=False,
    )
    jax.block_until_ready(eval_out)

    # Sanity checks against a host-side (numpy, float64) reference with
    # PyTorch semantics: training-mode BN (biased batch stats) + f32 Linear.
    def ref_bn_linear(x, gamma, beta, w):
        x = np.asarray(x, np.float64)
        g = np.asarray(gamma, np.float64)
        b = np.asarray(beta, np.float64)
        m = x.mean(axis=0, keepdims=True)
        v = ((x - m) ** 2).mean(axis=0, keepdims=True)
        f = (x - m) / np.sqrt(v + BN_EPS) * g + b
        return f @ np.asarray(w, np.float64).T

    x_np_host = np.asarray(image_features_non_proj[:, 0])
    x_p_host = np.asarray(image_features[:, 0])
    bn = np.asarray(params["bn_pack"])
    ref_np = ref_bn_linear(x_np_host, bn[0], bn[1], np.asarray(params["cls_np_w"]))
    ref_p = ref_bn_linear(x_p_host, bn[2, :D_PROJ], bn[3, :D_PROJ],
                          np.asarray(params["cls_p_w"]))

    assert scores[0].shape == (B, NUM_CLASSES)
    assert scores[1].shape == (B, NUM_CLASSES)
    assert np.allclose(np.asarray(scores[0]), ref_np, atol=1e-3, rtol=1e-2)
    assert np.allclose(np.asarray(scores[1]), ref_p, atol=1e-3, rtol=1e-2)

    assert eval_out.shape == (B, D_NON_PROJ + D_PROJ)
    assert np.allclose(
        np.asarray(eval_out),
        np.concatenate((x_np_host, x_p_host), axis=1),
        atol=0, rtol=0)
    assert feats_list[0].shape == (B, D_NON_PROJ)
    assert feats_list[1].shape == (B, D_NON_PROJ)
    assert feats_list[2].shape == (B, D_PROJ)
    assert feats.shape == (B, D_PROJ)

    print("KERNEL_OK")
</pallas_src>

<mosaic_0001>
module attributes {stable_mosaic.version = 11 : i64} {
  func.func @_coop_head_kernel(%arg0: memref<8x768xf32, #tpu.memory_space<vmem>>, %arg1: memref<8x512xf32, #tpu.memory_space<vmem>>, %arg2: memref<4x768xf32, #tpu.memory_space<vmem>>, %arg3: memref<768x256xf32, #tpu.memory_space<any>>, %arg4: memref<16x256xf32, #tpu.memory_space<vmem>>, %arg5: memref<768x256xf32, #tpu.memory_space<vmem>>, %arg6: memref<!tpu.dma_semaphore, #tpu.memory_space<semaphore_mem>>) attributes {dimension_semantics = [], scalar_prefetch = 0 : i64, scratch_operands = 2 : i64, tpu.core_type = #tpu.core_type<tc>} {
    tpu.enqueue_dma source(%arg3 : memref<768x256xf32, #tpu.memory_space<any>>) target(%arg5 : memref<768x256xf32, #tpu.memory_space<vmem>>) target_semaphore(%arg6 : memref<!tpu.dma_semaphore, #tpu.memory_space<semaphore_mem>>)
    %c0 = arith.constant 0 : index
    %c0_0 = arith.constant 0 : index
    %0 = vector.load %arg0[%c0, %c0_0] : memref<8x768xf32, #tpu.memory_space<vmem>>, vector<8x768xf32>
    %c0_1 = arith.constant 0 : index
    %c0_2 = arith.constant 0 : index
    %1 = vector.load %arg2[%c0_1, %c0_2] : memref<4x768xf32, #tpu.memory_space<vmem>>, vector<1x768xf32>
    %c1 = arith.constant 1 : index
    %c0_3 = arith.constant 0 : index
    %2 = vector.load %arg2[%c1, %c0_3] : memref<4x768xf32, #tpu.memory_space<vmem>>, vector<1x768xf32>
    %cst = arith.constant dense<0.000000e+00> : vector<768xf32>
    %3 = vector.multi_reduction <add>, %0, %cst [0] : vector<8x768xf32> to vector<768xf32>
    %4 = vector.shape_cast %3 : vector<768xf32> to vector<1x768xf32>
    %cst_4 = arith.constant 8.000000e+00 : f32
    %5 = vector.broadcast %cst_4 : f32 to vector<1x768xf32>
    %6 = arith.divf %4, %5 : vector<1x768xf32>
    %7 = vector.broadcast %6 : vector<1x768xf32> to vector<8x768xf32>
    %8 = arith.subf %0, %7 : vector<8x768xf32>
    %9 = arith.mulf %8, %8 : vector<8x768xf32>
    %cst_5 = arith.constant dense<0.000000e+00> : vector<768xf32>
    %10 = vector.multi_reduction <add>, %9, %cst_5 [0] : vector<8x768xf32> to vector<768xf32>
    %11 = vector.shape_cast %10 : vector<768xf32> to vector<1x768xf32>
    %cst_6 = arith.constant 8.000000e+00 : f32
    %12 = vector.broadcast %cst_6 : f32 to vector<1x768xf32>
    %13 = arith.divf %11, %12 : vector<1x768xf32>
    %cst_7 = arith.constant 9.99999974E-6 : f32
    %14 = vector.broadcast %cst_7 : f32 to vector<1x768xf32>
    %15 = arith.addf %13, %14 : vector<1x768xf32>
    %16 = math.rsqrt %15 : vector<1x768xf32>
    %17 = vector.broadcast %16 : vector<1x768xf32> to vector<8x768xf32>
    %18 = arith.mulf %8, %17 : vector<8x768xf32>
    %19 = vector.broadcast %1 : vector<1x768xf32> to vector<8x768xf32>
    %20 = arith.mulf %18, %19 : vector<8x768xf32>
    %21 = vector.broadcast %2 : vector<1x768xf32> to vector<8x768xf32>
    %22 = arith.addf %20, %21 : vector<8x768xf32>
    %c0_8 = arith.constant 0 : index
    %c0_9 = arith.constant 0 : index
    %23 = vector.load %arg1[%c0_8, %c0_9] : memref<8x512xf32, #tpu.memory_space<vmem>>, vector<8x512xf32>
    %c2 = arith.constant 2 : index
    %c0_10 = arith.constant 0 : index
    %24 = vector.load %arg2[%c2, %c0_10] : memref<4x768xf32, #tpu.memory_space<vmem>>, vector<1x512xf32>
    %c3 = arith.constant 3 : index
    %c0_11 = arith.constant 0 : index
    %25 = vector.load %arg2[%c3, %c0_11] : memref<4x768xf32, #tpu.memory_space<vmem>>, vector<1x512xf32>
    %cst_12 = arith.constant dense<0.000000e+00> : vector<512xf32>
    %26 = vector.multi_reduction <add>, %23, %cst_12 [0] : vector<8x512xf32> to vector<512xf32>
    %27 = vector.shape_cast %26 : vector<512xf32> to vector<1x512xf32>
    %cst_13 = arith.constant 8.000000e+00 : f32
    %28 = vector.broadcast %cst_13 : f32 to vector<1x512xf32>
    %29 = arith.divf %27, %28 : vector<1x512xf32>
    %30 = vector.broadcast %29 : vector<1x512xf32> to vector<8x512xf32>
    %31 = arith.subf %23, %30 : vector<8x512xf32>
    %32 = arith.mulf %31, %31 : vector<8x512xf32>
    %cst_14 = arith.constant dense<0.000000e+00> : vector<512xf32>
    %33 = vector.multi_reduction <add>, %32, %cst_14 [0] : vector<8x512xf32> to vector<512xf32>
    %34 = vector.shape_cast %33 : vector<512xf32> to vector<1x512xf32>
    %cst_15 = arith.constant 8.000000e+00 : f32
    %35 = vector.broadcast %cst_15 : f32 to vector<1x512xf32>
    %36 = arith.divf %34, %35 : vector<1x512xf32>
    %cst_16 = arith.constant 9.99999974E-6 : f32
    %37 = vector.broadcast %cst_16 : f32 to vector<1x512xf32>
    %38 = arith.addf %36, %37 : vector<1x512xf32>
    %39 = math.rsqrt %38 : vector<1x512xf32>
    %40 = vector.broadcast %39 : vector<1x512xf32> to vector<8x512xf32>
    %41 = arith.mulf %31, %40 : vector<8x512xf32>
    %42 = vector.broadcast %24 : vector<1x512xf32> to vector<8x512xf32>
    %43 = arith.mulf %41, %42 : vector<8x512xf32>
    %44 = vector.broadcast %25 : vector<1x512xf32> to vector<8x512xf32>
    %45 = arith.addf %43, %44 : vector<8x512xf32>
    %cst_17 = arith.constant 0.000000e+00 : f32
    %46 = vector.broadcast %cst_17 : f32 to vector<8x256xf32>
    %47 = tpu.concatenate %45, %46 in 1 : vector<8x512xf32>, vector<8x256xf32> -> vector<8x768xf32>
    %48 = tpu.concatenate %22, %47 in 0 : vector<8x768xf32>, vector<8x768xf32> -> vector<16x768xf32>
    tpu.wait_dma2 semaphore(%arg6 : memref<!tpu.dma_semaphore, #tpu.memory_space<semaphore_mem>>) src(%arg3 : memref<768x256xf32, #tpu.memory_space<any>>) dst(%arg5 : memref<768x256xf32, #tpu.memory_space<vmem>>)
    %c0_18 = arith.constant 0 : index
    %c0_19 = arith.constant 0 : index
    %49 = vector.load %arg5[%c0_18, %c0_19] : memref<768x256xf32, #tpu.memory_space<vmem>>, vector<768x256xf32>
    %cst_20 = arith.constant dense<0.000000e+00> : vector<16x256xf32>
    %50 = tpu.matmul %48, %49, %cst_20 {dimension_numbers = #tpu.dot_dimension_numbers<[1], [0], [0], [1], [0, 0, 1, 1], [], []>} : vector<16x768xf32>, vector<768x256xf32>, vector<16x256xf32> -> vector<16x256xf32>
    %c0_21 = arith.constant 0 : index
    %c0_22 = arith.constant 0 : index
    %51 = vector.load %arg4[%c0_21, %c0_22] : memref<16x256xf32, #tpu.memory_space<vmem>>, vector<16x256xf32>
    tpu.vector_store %arg4[%c0_21, %c0_22], %50 {strides = array<i32>} : memref<16x256xf32, #tpu.memory_space<vmem>>, vector<16x256xf32>,
    return
  }
}

</mosaic_0001>

<llo_original>
// kernel: custom_clip_coop_forward.1
$region0: #{custom_clip_coop_forward.1}
  #allocation0 [shape = 'u32[]', space=smem, size = 0x4, offset = 0x4, fixed_abs, tag = 'smem constant byte address 0x4 - core index']
  #allocation1 [shape = 'u32[144,128]{1,0:T(1,128)}', space=vmem, size = 0x12000, scoped, tag = 'internal scratch']
  #allocation2 [shape = 'f32[768,256]{1,0:T(8,128)}', space=vmem, size = 0xc0000, scoped, tag = 'scratch operand']
  #allocation3 [shape = 's32[1]{0}', space=sflag, size = 0x4, scoped, tag = 'scratch operand']
  #allocation4 [shape = 's32[]', space=sflag, size = 0x4, offset = 0, fixed_abs, tag = 'sflag constant byte address 0x0 - dummy sync flag']
  #allocation5 [shape = 's32[]', space=sflag, size = 0x4, offset = 0, fixed_abs, tag = 'sflag constant byte address 0x0 - dummy sync flag']
  #allocation6 [shape = 'u32[]', space=smem, size = 0x4, offset = 0x44, fixed_abs, tag = 'smem constant byte address 0x44 - assertion arg 0']
  #allocation7 [shape = 'u32[]', space=smem, size = 0x4, offset = 0x48, fixed_abs, tag = 'smem constant byte address 0x48 - assertion arg 1']
  %s0 = inlined_call_operand.vmem [shape: f32[8,768], index: 0, kind: input, shape index: {}]
  %s1 = inlined_call_operand.vmem [shape: f32[8,512], index: 1, kind: input, shape index: {}]
  %s2 = inlined_call_operand.vmem [shape: f32[4,768], index: 2, kind: input, shape index: {}]
  %s3 = inlined_call_operand.hbm [shape: f32[768,256], index: 3, kind: input, shape index: {}]
  %s4 = inlined_call_operand.vmem [shape: f32[16,256], index: 4, kind: output, shape index: {}]
  %s5 = sld [smem:[#allocation0]]
  $region26: #{custom_clip_coop_forward.1} parent=0
    _
  %s7 = ssub.s32 1, %s5
  %s8 = scalar_select 0, %s7, %s5
  // Predicated region
  $region2: #{custom_clip_coop_forward.1} parent=0 // pred_check
    _
  $region3: #{custom_clip_coop_forward.1} parent=0 // pred_check_branch
    %10 = sbr.rel (0) target = $region5
  $region4: #{custom_clip_coop_forward.1} parent=0 // pred_region
    _
  $region5: #{custom_clip_coop_forward.1} parent=0 // pred_fallthru
    _
  // Predicated region
  $region6: #{custom_clip_coop_forward.1} parent=0 // pred_check
    _
  $region7: #{custom_clip_coop_forward.1} parent=0 // pred_check_branch
    %12 = sbr.rel (0) target = $region9
  $region8: #{custom_clip_coop_forward.1} parent=0 // pred_region
    _
  $region9: #{custom_clip_coop_forward.1} parent=0 // pred_fallthru
    _
  // Predicated region
  $region10: #{custom_clip_coop_forward.1} parent=0 // pred_check
    _
  $region11: #{custom_clip_coop_forward.1} parent=0 // pred_check_branch
    %14 = sbr.rel (0) target = $region13
  $region12: #{custom_clip_coop_forward.1} parent=0 // pred_region
    _
  $region13: #{custom_clip_coop_forward.1} parent=0 // pred_fallthru
    _
  // Predicated region
  $region14: #{custom_clip_coop_forward.1} parent=0 // pred_check
    _
  $region15: #{custom_clip_coop_forward.1} parent=0 // pred_check_branch
    %16 = sbr.rel target = $region17
  $region16: #{custom_clip_coop_forward.1} parent=0 // pred_region
    %17 = sst [smem:[#allocation6]] [#allocation5]
    %18 = sst [smem:[#allocation7]] [#allocation4]
  $region17: #{custom_clip_coop_forward.1} parent=0 // pred_fallthru
    _
  %20 = shalt.err (0)
  %s22 = sshll.u32 [#allocation2], 4
  %s23 = int_to_ptr.vmem [resolvable:$true] %s22
  %25 = dma.hbm_to_vmem [thread:$0]  %s3, 24576, %s23, [#allocation3]
  %v26 = vld [vmem:[%s0] sm:$0xff]
  %v27 = vld [vmem:[%s0 + $0x8] sm:$0xff]
  %v28 = vld [vmem:[%s0 + $0x10] sm:$0xff]
  %v29 = vld [vmem:[%s0 + $0x18] sm:$0xff]
  %v30 = vld [vmem:[%s0 + $0x20] sm:$0xff]
  %v31 = vld [vmem:[%s0 + $0x28] sm:$0xff]
  %v32 = vld [vmem:[%s2] ss:$4 sm:$0x3f]
  %s33 = scalar_lea.vmem %s2, 1
  %v34 = vld [vmem:[%s33] ss:$4 sm:$0x3f]
  %v35 = vrot.slane %v26, 4
  %v36 = vadd.f32 %v26, %v35
  %v37 = vrot.slane %v36, 2
  %v38 = vadd.f32 %v36, %v37
  %v39 = vrot.slane %v38, 1
  %v40 = vadd.f32 %v38, %v39
  %v41 = vrot.slane %v27, 4
  %v42 = vadd.f32 %v27, %v41
  %v43 = vrot.slane %v42, 2
  %v44 = vadd.f32 %v42, %v43
  %v45 = vrot.slane %v44, 1
  %v46 = vadd.f32 %v44, %v45
  %v47 = vrot.slane %v28, 4
  %v48 = vadd.f32 %v28, %v47
  %v49 = vrot.slane %v48, 2
  %v50 = vadd.f32 %v48, %v49
  %v51 = vrot.slane %v50, 1
  %v52 = vadd.f32 %v50, %v51
  %v53 = vrot.slane %v29, 4
  %v54 = vadd.f32 %v29, %v53
  %v55 = vrot.slane %v54, 2
  %v56 = vadd.f32 %v54, %v55
  %v57 = vrot.slane %v56, 1
  %v58 = vadd.f32 %v56, %v57
  %v59 = vrot.slane %v30, 4
  %v60 = vadd.f32 %v30, %v59
  %v61 = vrot.slane %v60, 2
  %v62 = vadd.f32 %v60, %v61
  %v63 = vrot.slane %v62, 1
  %v64 = vadd.f32 %v62, %v63
  %v65 = vrot.slane %v31, 4
  %v66 = vadd.f32 %v31, %v65
  %v67 = vrot.slane %v66, 2
  %v68 = vadd.f32 %v66, %v67
  %v69 = vrot.slane %v68, 1
  %v70 = vadd.f32 %v68, %v69
  %v71 = vrcp.pop 8.0
  %v72 = vmul.f32 %v40, %v71
  %v73 = vmul.f32 %v46, %v71
  %v74 = vmul.f32 %v52, %v71
  %v75 = vmul.f32 %v58, %v71
  %v76 = vmul.f32 %v64, %v71
  %v77 = vmul.f32 %v70, %v71
  %v78 = vsub.f32 %v26, %v72
  %v79 = vsub.f32 %v27, %v73
  %v80 = vsub.f32 %v28, %v74
  %v81 = vsub.f32 %v29, %v75
  %v82 = vsub.f32 %v30, %v76
  %v83 = vsub.f32 %v31, %v77
  %v84 = vmul.f32 %v78, %v78
  %v85 = vmul.f32 %v79, %v79
  %v86 = vmul.f32 %v80, %v80
  %v87 = vmul.f32 %v81, %v81
  %v88 = vmul.f32 %v82, %v82
  %v89 = vmul.f32 %v83, %v83
  %v90 = vrot.slane %v84, 4
  %v91 = vadd.f32 %v84, %v90
  %v92 = vrot.slane %v91, 2
  %v93 = vadd.f32 %v91, %v92
  %v94 = vrot.slane %v93, 1
  %v95 = vadd.f32 %v93, %v94
  %v96 = vrot.slane %v85, 4
  %v97 = vadd.f32 %v85, %v96
  %v98 = vrot.slane %v97, 2
  %v99 = vadd.f32 %v97, %v98
  %v100 = vrot.slane %v99, 1
  %v101 = vadd.f32 %v99, %v100
  %v102 = vrot.slane %v86, 4
  %v103 = vadd.f32 %v86, %v102
  %v104 = vrot.slane %v103, 2
  %v105 = vadd.f32 %v103, %v104
  %v106 = vrot.slane %v105, 1
  %v107 = vadd.f32 %v105, %v106
  %v108 = vrot.slane %v87, 4
  %v109 = vadd.f32 %v87, %v108
  %v110 = vrot.slane %v109, 2
  %v111 = vadd.f32 %v109, %v110
  %v112 = vrot.slane %v111, 1
  %v113 = vadd.f32 %v111, %v112
  %v114 = vrot.slane %v88, 4
  %v115 = vadd.f32 %v88, %v114
  %v116 = vrot.slane %v115, 2
  %v117 = vadd.f32 %v115, %v116
  %v118 = vrot.slane %v117, 1
  %v119 = vadd.f32 %v117, %v118
  %v120 = vrot.slane %v89, 4
  %v121 = vadd.f32 %v89, %v120
  %v122 = vrot.slane %v121, 2
  %v123 = vadd.f32 %v121, %v122
  %v124 = vrot.slane %v123, 1
  %v125 = vadd.f32 %v123, %v124
  %v126 = vmul.f32 %v95, %v71
  %v127 = vmul.f32 %v101, %v71
  %v128 = vmul.f32 %v107, %v71
  %v129 = vmul.f32 %v113, %v71
  %v130 = vmul.f32 %v119, %v71
  %v131 = vmul.f32 %v125, %v71
  %v132 = vadd.f32 %v126, 1e-05
  %v133 = vadd.f32 %v127, 1e-05
  %v134 = vadd.f32 %v128, 1e-05
  %v135 = vadd.f32 %v129, 1e-05
  %v136 = vadd.f32 %v130, 1e-05
  %v137 = vadd.f32 %v131, 1e-05
  %v138 = vrsqrt.pop %v132
  %v139 = vrsqrt.pop %v133
  %v140 = vrsqrt.pop %v134
  %v141 = vrsqrt.pop %v135
  %v142 = vrsqrt.pop %v136
  %v143 = vrsqrt.pop %v137
  %v144 = vmul.f32 %v78, %v138
  %v145 = vmul.f32 %v79, %v139
  %v146 = vmul.f32 %v80, %v140
  %v147 = vmul.f32 %v81, %v141
  %v148 = vmul.f32 %v82, %v142
  %v149 = vmul.f32 %v83, %v143
  %v151 = vlaneseq
  %v152 = vshrl.u32 %v151, 7
  %v153 = vsub.s32 0, %v152
  %v154 = vrot.slane %v32, %v153
  %v155 = vlaneseq
  %v156 = vshrl.u32 %v155, 7
  %v157 = vsub.s32 1, %v156
  %v158 = vrot.slane %v32, %v157
  %v159 = vlaneseq
  %v160 = vshrl.u32 %v159, 7
  %v161 = vsub.s32 2, %v160
  %v162 = vrot.slane %v32, %v161
  %v163 = vlaneseq
  %v164 = vshrl.u32 %v163, 7
  %v165 = vsub.s32 3, %v164
  %v166 = vrot.slane %v32, %v165
  %v167 = vlaneseq
  %v168 = vshrl.u32 %v167, 7
  %v169 = vsub.s32 4, %v168
  %v170 = vrot.slane %v32, %v169
  %v171 = vlaneseq
  %v172 = vshrl.u32 %v171, 7
  %v173 = vsub.s32 5, %v172
  %v174 = vrot.slane %v32, %v173
  %v181 = vmul.f32 %v144, %v154
  %v182 = vmul.f32 %v145, %v158
  %v183 = vmul.f32 %v146, %v162
  %v184 = vmul.f32 %v147, %v166
  %v185 = vmul.f32 %v148, %v170
  %v186 = vmul.f32 %v149, %v174
  %v188 = vlaneseq
  %v189 = vshrl.u32 %v188, 7
  %v190 = vsub.s32 0, %v189
  %v191 = vrot.slane %v34, %v190
  %v192 = vlaneseq
  %v193 = vshrl.u32 %v192, 7
  %v194 = vsub.s32 1, %v193
  %v195 = vrot.slane %v34, %v194
  %v196 = vlaneseq
  %v197 = vshrl.u32 %v196, 7
  %v198 = vsub.s32 2, %v197
  %v199 = vrot.slane %v34, %v198
  %v200 = vlaneseq
  %v201 = vshrl.u32 %v200, 7
  %v202 = vsub.s32 3, %v201
  %v203 = vrot.slane %v34, %v202
  %v204 = vlaneseq
  %v205 = vshrl.u32 %v204, 7
  %v206 = vsub.s32 4, %v205
  %v207 = vrot.slane %v34, %v206
  %v208 = vlaneseq
  %v209 = vshrl.u32 %v208, 7
  %v210 = vsub.s32 5, %v209
  %v211 = vrot.slane %v34, %v210
  %v218 = vadd.f32 %v181, %v191
  %v219 = vadd.f32 %v182, %v195
  %v220 = vadd.f32 %v183, %v199
  %v221 = vadd.f32 %v184, %v203
  %v222 = vadd.f32 %v185, %v207
  %v223 = vadd.f32 %v186, %v211
  %v224 = vld [vmem:[%s1] sm:$0xff]
  %v225 = vld [vmem:[%s1 + $0x8] sm:$0xff]
  %v226 = vld [vmem:[%s1 + $0x10] sm:$0xff]
  %v227 = vld [vmem:[%s1 + $0x18] sm:$0xff]
  %s228 = scalar_lea.vmem %s2, 2
  %v229 = vld [vmem:[%s228] ss:$4 sm:$0xf]
  %s230 = scalar_lea.vmem %s2, 3
  %v231 = vld [vmem:[%s230] ss:$4 sm:$0xf]
  %v232 = vrot.slane %v224, 4
  %v233 = vadd.f32 %v224, %v232
  %v234 = vrot.slane %v233, 2
  %v235 = vadd.f32 %v233, %v234
  %v236 = vrot.slane %v235, 1
  %v237 = vadd.f32 %v235, %v236
  %v238 = vrot.slane %v225, 4
  %v239 = vadd.f32 %v225, %v238
  %v240 = vrot.slane %v239, 2
  %v241 = vadd.f32 %v239, %v240
  %v242 = vrot.slane %v241, 1
  %v243 = vadd.f32 %v241, %v242
  %v244 = vrot.slane %v226, 4
  %v245 = vadd.f32 %v226, %v244
  %v246 = vrot.slane %v245, 2
  %v247 = vadd.f32 %v245, %v246
  %v248 = vrot.slane %v247, 1
  %v249 = vadd.f32 %v247, %v248
  %v250 = vrot.slane %v227, 4
  %v251 = vadd.f32 %v227, %v250
  %v252 = vrot.slane %v251, 2
  %v253 = vadd.f32 %v251, %v252
  %v254 = vrot.slane %v253, 1
  %v255 = vadd.f32 %v253, %v254
  %v256 = vmul.f32 %v237, %v71
  %v257 = vmul.f32 %v243, %v71
  %v258 = vmul.f32 %v249, %v71
  %v259 = vmul.f32 %v255, %v71
  %v260 = vsub.f32 %v224, %v256
  %v261 = vsub.f32 %v225, %v257
  %v262 = vsub.f32 %v226, %v258
  %v263 = vsub.f32 %v227, %v259
  %v264 = vmul.f32 %v260, %v260
  %v265 = vmul.f32 %v261, %v261
  %v266 = vmul.f32 %v262, %v262
  %v267 = vmul.f32 %v263, %v263
  %v268 = vrot.slane %v264, 4
  %v269 = vadd.f32 %v264, %v268
  %v270 = vrot.slane %v269, 2
  %v271 = vadd.f32 %v269, %v270
  %v272 = vrot.slane %v271, 1
  %v273 = vadd.f32 %v271, %v272
  %v274 = vrot.slane %v265, 4
  %v275 = vadd.f32 %v265, %v274
  %v276 = vrot.slane %v275, 2
  %v277 = vadd.f32 %v275, %v276
  %v278 = vrot.slane %v277, 1
  %v279 = vadd.f32 %v277, %v278
  %v280 = vrot.slane %v266, 4
  %v281 = vadd.f32 %v266, %v280
  %v282 = vrot.slane %v281, 2
  %v283 = vadd.f32 %v281, %v282
  %v284 = vrot.slane %v283, 1
  %v285 = vadd.f32 %v283, %v284
  %v286 = vrot.slane %v267, 4
  %v287 = vadd.f32 %v267, %v286
  %v288 = vrot.slane %v287, 2
  %v289 = vadd.f32 %v287, %v288
  %v290 = vrot.slane %v289, 1
  %v291 = vadd.f32 %v289, %v290
  %v292 = vmul.f32 %v273, %v71
  %v293 = vmul.f32 %v279, %v71
  %v294 = vmul.f32 %v285, %v71
  %v295 = vmul.f32 %v291, %v71
  %v296 = vadd.f32 %v292, 1e-05
  %v297 = vadd.f32 %v293, 1e-05
  %v298 = vadd.f32 %v294, 1e-05
  %v299 = vadd.f32 %v295, 1e-05
  %v300 = vrsqrt.pop %v296
  %v301 = vrsqrt.pop %v297
  %v302 = vrsqrt.pop %v298
  %v303 = vrsqrt.pop %v299
  %v304 = vmul.f32 %v260, %v300
  %v305 = vmul.f32 %v261, %v301
  %v306 = vmul.f32 %v262, %v302
  %v307 = vmul.f32 %v263, %v303
  %v309 = vlaneseq
  %v310 = vshrl.u32 %v309, 7
  %v311 = vsub.s32 0, %v310
  %v312 = vrot.slane %v229, %v311
  %v313 = vlaneseq
  %v314 = vshrl.u32 %v313, 7
  %v315 = vsub.s32 1, %v314
  %v316 = vrot.slane %v229, %v315
  %v317 = vlaneseq
  %v318 = vshrl.u32 %v317, 7
  %v319 = vsub.s32 2, %v318
  %v320 = vrot.slane %v229, %v319
  %v321 = vlaneseq
  %v322 = vshrl.u32 %v321, 7
  %v323 = vsub.s32 3, %v322
  %v324 = vrot.slane %v229, %v323
  %v329 = vmul.f32 %v304, %v312
  %v330 = vmul.f32 %v305, %v316
  %v331 = vmul.f32 %v306, %v320
  %v332 = vmul.f32 %v307, %v324
  %v334 = vlaneseq
  %v335 = vshrl.u32 %v334, 7
  %v336 = vsub.s32 0, %v335
  %v337 = vrot.slane %v231, %v336
  %v338 = vlaneseq
  %v339 = vshrl.u32 %v338, 7
  %v340 = vsub.s32 1, %v339
  %v341 = vrot.slane %v231, %v340
  %v342 = vlaneseq
  %v343 = vshrl.u32 %v342, 7
  %v344 = vsub.s32 2, %v343
  %v345 = vrot.slane %v231, %v344
  %v346 = vlaneseq
  %v347 = vshrl.u32 %v346, 7
  %v348 = vsub.s32 3, %v347
  %v349 = vrot.slane %v231, %v348
  %v354 = vadd.f32 %v329, %v337
  %v355 = vadd.f32 %v330, %v341
  %v356 = vadd.f32 %v331, %v345
  %v357 = vadd.f32 %v332, %v349
  %s358 = smul.u32 8, 96
  %s359 = smul.u32 %s358, 2
  %s360 = sshll.u32 %s359, 4
  %361 = dma.done [#allocation3], %s360
  %v362 = vld [vmem:[#allocation2] sm:$0xff]
  %v363 = vld [vmem:[#allocation2 + $0x8] sm:$0xff]
  %v364 = vld [vmem:[#allocation2 + $0x10] sm:$0xff]
  %v365 = vld [vmem:[#allocation2 + $0x18] sm:$0xff]
  %v366 = vld [vmem:[#allocation2 + $0x20] sm:$0xff]
  %v367 = vld [vmem:[#allocation2 + $0x28] sm:$0xff]
  %v368 = vld [vmem:[#allocation2 + $0x30] sm:$0xff]
  %v369 = vld [vmem:[#allocation2 + $0x38] sm:$0xff]
  %v370 = vld [vmem:[#allocation2 + $0x40] sm:$0xff]
  %v371 = vld [vmem:[#allocation2 + $0x48] sm:$0xff]
  %v372 = vld [vmem:[#allocation2 + $0x50] sm:$0xff]
  %v373 = vld [vmem:[#allocation2 + $0x58] sm:$0xff]
  %v374 = vld [vmem:[#allocation2 + $0x60] sm:$0xff]
  %v375 = vld [vmem:[#allocation2 + $0x68] sm:$0xff]
  %v376 = vld [vmem:[#allocation2 + $0x70] sm:$0xff]
  %v377 = vld [vmem:[#allocation2 + $0x78] sm:$0xff]
  %v378 = vld [vmem:[#allocation2 + $0x80] sm:$0xff]
  %v379 = vld [vmem:[#allocation2 + $0x88] sm:$0xff]
  %v380 = vld [vmem:[#allocation2 + $0x90] sm:$0xff]
  %v381 = vld [vmem:[#allocation2 + $0x98] sm:$0xff]
  %v382 = vld [vmem:[#allocation2 + $0xa0] sm:$0xff]
  %v383 = vld [vmem:[#allocation2 + $0xa8] sm:$0xff]
  %v384 = vld [vmem:[#allocation2 + $0xb0] sm:$0xff]
  %v385 = vld [vmem:[#allocation2 + $0xb8] sm:$0xff]
  %v386 = vld [vmem:[#allocation2 + $0xc0] sm:$0xff]
  %v387 = vld [vmem:[#allocation2 + $0xc8] sm:$0xff]
  %v388 = vld [vmem:[#allocation2 + $0xd0] sm:$0xff]
  %v389 = vld [vmem:[#allocation2 + $0xd8] sm:$0xff]
  %v390 = vld [vmem:[#allocation2 + $0xe0] sm:$0xff]
  %v391 = vld [vmem:[#allocation2 + $0xe8] sm:$0xff]
  %v392 = vld [vmem:[#allocation2 + $0xf0] sm:$0xff]
  %v393 = vld [vmem:[#allocation2 + $0xf8] sm:$0xff]
  %v394 = vld [vmem:[#allocation2 + $0x100] sm:$0xff]
  %v395 = vld [vmem:[#allocation2 + $0x108] sm:$0xff]
  %v396 = vld [vmem:[#allocation2 + $0x110] sm:$0xff]
  %v397 = vld [vmem:[#allocation2 + $0x118] sm:$0xff]
  %v398 = vld [vmem:[#allocation2 + $0x120] sm:$0xff]
  %v399 = vld [vmem:[#allocation2 + $0x128] sm:$0xff]
  %v400 = vld [vmem:[#allocation2 + $0x130] sm:$0xff]
  %v401 = vld [vmem:[#allocation2 + $0x138] sm:$0xff]
  %v402 = vld [vmem:[#allocation2 + $0x140] sm:$0xff]
  %v403 = vld [vmem:[#allocation2 + $0x148] sm:$0xff]
  %v404 = vld [vmem:[#allocation2 + $0x150] sm:$0xff]
  %v405 = vld [vmem:[#allocation2 + $0x158] sm:$0xff]
  %v406 = vld [vmem:[#allocation2 + $0x160] sm:$0xff]
  %v407 = vld [vmem:[#allocation2 + $0x168] sm:$0xff]
  %v408 = vld [vmem:[#allocation2 + $0x170] sm:$0xff]
  %v409 = vld [vmem:[#allocation2 + $0x178] sm:$0xff]
  %v410 = vld [vmem:[#allocation2 + $0x180] sm:$0xff]
  %v411 = vld [vmem:[#allocation2 + $0x188] sm:$0xff]
  %v412 = vld [vmem:[#allocation2 + $0x190] sm:$0xff]
  %v413 = vld [vmem:[#allocation2 + $0x198] sm:$0xff]
  %v414 = vld [vmem:[#allocation2 + $0x1a0] sm:$0xff]
  %v415 = vld [vmem:[#allocation2 + $0x1a8] sm:$0xff]
  %v416 = vld [vmem:[#allocation2 + $0x1b0] sm:$0xff]
  %v417 = vld [vmem:[#allocation2 + $0x1b8] sm:$0xff]
  %v418 = vld [vmem:[#allocation2 + $0x1c0] sm:$0xff]
  %v419 = vld [vmem:[#allocation2 + $0x1c8] sm:$0xff]
  %v420 = vld [vmem:[#allocation2 + $0x1d0] sm:$0xff]
  %v421 = vld [vmem:[#allocation2 + $0x1d8] sm:$0xff]
  %v422 = vld [vmem:[#allocation2 + $0x1e0] sm:$0xff]
  %v423 = vld [vmem:[#allocation2 + $0x1e8] sm:$0xff]
  %v424 = vld [vmem:[#allocation2 + $0x1f0] sm:$0xff]
  %v425 = vld [vmem:[#allocation2 + $0x1f8] sm:$0xff]
  %v426 = vld [vmem:[#allocation2 + $0x200] sm:$0xff]
  %v427 = vld [vmem:[#allocation2 + $0x208] sm:$0xff]
  %v428 = vld [vmem:[#allocation2 + $0x210] sm:$0xff]
  %v429 = vld [vmem:[#allocation2 + $0x218] sm:$0xff]
  %v430 = vld [vmem:[#allocation2 + $0x220] sm:$0xff]
  %v431 = vld [vmem:[#allocation2 + $0x228] sm:$0xff]
  %v432 = vld [vmem:[#allocation2 + $0x230] sm:$0xff]
  %v433 = vld [vmem:[#allocation2 + $0x238] sm:$0xff]
  %v434 = vld [vmem:[#allocation2 + $0x240] sm:$0xff]
  %v435 = vld [vmem:[#allocation2 + $0x248] sm:$0xff]
  %v436 = vld [vmem:[#allocation2 + $0x250] sm:$0xff]
  %v437 = vld [vmem:[#allocation2 + $0x258] sm:$0xff]
  %v438 = vld [vmem:[#allocation2 + $0x260] sm:$0xff]
  %v439 = vld [vmem:[#allocation2 + $0x268] sm:$0xff]
  %v440 = vld [vmem:[#allocation2 + $0x270] sm:$0xff]
  %v441 = vld [vmem:[#allocation2 + $0x278] sm:$0xff]
  %v442 = vld [vmem:[#allocation2 + $0x280] sm:$0xff]
  %v443 = vld [vmem:[#allocation2 + $0x288] sm:$0xff]
  %v444 = vld [vmem:[#allocation2 + $0x290] sm:$0xff]
  %v445 = vld [vmem:[#allocation2 + $0x298] sm:$0xff]
  %v446 = vld [vmem:[#allocation2 + $0x2a0] sm:$0xff]
  %v447 = vld [vmem:[#allocation2 + $0x2a8] sm:$0xff]
  %v448 = vld [vmem:[#allocation2 + $0x2b0] sm:$0xff]
  %v449 = vld [vmem:[#allocation2 + $0x2b8] sm:$0xff]
  %v450 = vld [vmem:[#allocation2 + $0x2c0] sm:$0xff]
  %v451 = vld [vmem:[#allocation2 + $0x2c8] sm:$0xff]
  %v452 = vld [vmem:[#allocation2 + $0x2d0] sm:$0xff]
  %v453 = vld [vmem:[#allocation2 + $0x2d8] sm:$0xff]
  %v454 = vld [vmem:[#allocation2 + $0x2e0] sm:$0xff]
  %v455 = vld [vmem:[#allocation2 + $0x2e8] sm:$0xff]
  %v456 = vld [vmem:[#allocation2 + $0x2f0] sm:$0xff]
  %v457 = vld [vmem:[#allocation2 + $0x2f8] sm:$0xff]
  %v458 = vld [vmem:[#allocation2 + $0x300] sm:$0xff]
  %v459 = vld [vmem:[#allocation2 + $0x308] sm:$0xff]
  %v460 = vld [vmem:[#allocation2 + $0x310] sm:$0xff]
  %v461 = vld [vmem:[#allocation2 + $0x318] sm:$0xff]
  %v462 = vld [vmem:[#allocation2 + $0x320] sm:$0xff]
  %v463 = vld [vmem:[#allocation2 + $0x328] sm:$0xff]
  %v464 = vld [vmem:[#allocation2 + $0x330] sm:$0xff]
  %v465 = vld [vmem:[#allocation2 + $0x338] sm:$0xff]
  %v466 = vld [vmem:[#allocation2 + $0x340] sm:$0xff]
  %v467 = vld [vmem:[#allocation2 + $0x348] sm:$0xff]
  %v468 = vld [vmem:[#allocation2 + $0x350] sm:$0xff]
  %v469 = vld [vmem:[#allocation2 + $0x358] sm:$0xff]
  %v470 = vld [vmem:[#allocation2 + $0x360] sm:$0xff]
  %v471 = vld [vmem:[#allocation2 + $0x368] sm:$0xff]
  %v472 = vld [vmem:[#allocation2 + $0x370] sm:$0xff]
  %v473 = vld [vmem:[#allocation2 + $0x378] sm:$0xff]
  %v474 = vld [vmem:[#allocation2 + $0x380] sm:$0xff]
  %v475 = vld [vmem:[#allocation2 + $0x388] sm:$0xff]
  %v476 = vld [vmem:[#allocation2 + $0x390] sm:$0xff]
  %v477 = vld [vmem:[#allocation2 + $0x398] sm:$0xff]
  %v478 = vld [vmem:[#allocation2 + $0x3a0] sm:$0xff]
  %v479 = vld [vmem:[#allocation2 + $0x3a8] sm:$0xff]
  %v480 = vld [vmem:[#allocation2 + $0x3b0] sm:$0xff]
  %v481 = vld [vmem:[#allocation2 + $0x3b8] sm:$0xff]
  %v482 = vld [vmem:[#allocation2 + $0x3c0] sm:$0xff]
  %v483 = vld [vmem:[#allocation2 + $0x3c8] sm:$0xff]
  %v484 = vld [vmem:[#allocation2 + $0x3d0] sm:$0xff]
  %v485 = vld [vmem:[#allocation2 + $0x3d8] sm:$0xff]
  %v486 = vld [vmem:[#allocation2 + $0x3e0] sm:$0xff]
  %v487 = vld [vmem:[#allocation2 + $0x3e8] sm:$0xff]
  %v488 = vld [vmem:[#allocation2 + $0x3f0] sm:$0xff]
  %v489 = vld [vmem:[#allocation2 + $0x3f8] sm:$0xff]
  %v490 = vld [vmem:[#allocation2 + $0x400] sm:$0xff]
  %v491 = vld [vmem:[#allocation2 + $0x408] sm:$0xff]
  %v492 = vld [vmem:[#allocation2 + $0x410] sm:$0xff]
  %v493 = vld [vmem:[#allocation2 + $0x418] sm:$0xff]
  %v494 = vld [vmem:[#allocation2 + $0x420] sm:$0xff]
  %v495 = vld [vmem:[#allocation2 + $0x428] sm:$0xff]
  %v496 = vld [vmem:[#allocation2 + $0x430] sm:$0xff]
  %v497 = vld [vmem:[#allocation2 + $0x438] sm:$0xff]
  %v498 = vld [vmem:[#allocation2 + $0x440] sm:$0xff]
  %v499 = vld [vmem:[#allocation2 + $0x448] sm:$0xff]
  %v500 = vld [vmem:[#allocation2 + $0x450] sm:$0xff]
  %v501 = vld [vmem:[#allocation2 + $0x458] sm:$0xff]
  %v502 = vld [vmem:[#allocation2 + $0x460] sm:$0xff]
  %v503 = vld [vmem:[#allocation2 + $0x468] sm:$0xff]
  %v504 = vld [vmem:[#allocation2 + $0x470] sm:$0xff]
  %v505 = vld [vmem:[#allocation2 + $0x478] sm:$0xff]
  %v506 = vld [vmem:[#allocation2 + $0x480] sm:$0xff]
  %v507 = vld [vmem:[#allocation2 + $0x488] sm:$0xff]
  %v508 = vld [vmem:[#allocation2 + $0x490] sm:$0xff]
  %v509 = vld [vmem:[#allocation2 + $0x498] sm:$0xff]
  %v510 = vld [vmem:[#allocation2 + $0x4a0] sm:$0xff]
  %v511 = vld [vmem:[#allocation2 + $0x4a8] sm:$0xff]
  %v512 = vld [vmem:[#allocation2 + $0x4b0] sm:$0xff]
  %v513 = vld [vmem:[#allocation2 + $0x4b8] sm:$0xff]
  %v514 = vld [vmem:[#allocation2 + $0x4c0] sm:$0xff]
  %v515 = vld [vmem:[#allocation2 + $0x4c8] sm:$0xff]
  %v516 = vld [vmem:[#allocation2 + $0x4d0] sm:$0xff]
  %v517 = vld [vmem:[#allocation2 + $0x4d8] sm:$0xff]
  %v518 = vld [vmem:[#allocation2 + $0x4e0] sm:$0xff]
  %v519 = vld [vmem:[#allocation2 + $0x4e8] sm:$0xff]
  %v520 = vld [vmem:[#allocation2 + $0x4f0] sm:$0xff]
  %v521 = vld [vmem:[#allocation2 + $0x4f8] sm:$0xff]
  %v522 = vld [vmem:[#allocation2 + $0x500] sm:$0xff]
  %v523 = vld [vmem:[#allocation2 + $0x508] sm:$0xff]
  %v524 = vld [vmem:[#allocation2 + $0x510] sm:$0xff]
  %v525 = vld [vmem:[#allocation2 + $0x518] sm:$0xff]
  %v526 = vld [vmem:[#allocation2 + $0x520] sm:$0xff]
  %v527 = vld [vmem:[#allocation2 + $0x528] sm:$0xff]
  %v528 = vld [vmem:[#allocation2 + $0x530] sm:$0xff]
  %v529 = vld [vmem:[#allocation2 + $0x538] sm:$0xff]
  %v530 = vld [vmem:[#allocation2 + $0x540] sm:$0xff]
  %v531 = vld [vmem:[#allocation2 + $0x548] sm:$0xff]
  %v532 = vld [vmem:[#allocation2 + $0x550] sm:$0xff]
  %v533 = vld [vmem:[#allocation2 + $0x558] sm:$0xff]
  %v534 = vld [vmem:[#allocation2 + $0x560] sm:$0xff]
  %v535 = vld [vmem:[#allocation2 + $0x568] sm:$0xff]
  %v536 = vld [vmem:[#allocation2 + $0x570] sm:$0xff]
  %v537 = vld [vmem:[#allocation2 + $0x578] sm:$0xff]
  %v538 = vld [vmem:[#allocation2 + $0x580] sm:$0xff]
  %v539 = vld [vmem:[#allocation2 + $0x588] sm:$0xff]
  %v540 = vld [vmem:[#allocation2 + $0x590] sm:$0xff]
  %v541 = vld [vmem:[#allocation2 + $0x598] sm:$0xff]
  %v542 = vld [vmem:[#allocation2 + $0x5a0] sm:$0xff]
  %v543 = vld [vmem:[#allocation2 + $0x5a8] sm:$0xff]
  %v544 = vld [vmem:[#allocation2 + $0x5b0] sm:$0xff]
  %v545 = vld [vmem:[#allocation2 + $0x5b8] sm:$0xff]
  %v546 = vld [vmem:[#allocation2 + $0x5c0] sm:$0xff]
  %v547 = vld [vmem:[#allocation2 + $0x5c8] sm:$0xff]
  %v548 = vld [vmem:[#allocation2 + $0x5d0] sm:$0xff]
  %v549 = vld [vmem:[#allocation2 + $0x5d8] sm:$0xff]
  %v550 = vld [vmem:[#allocation2 + $0x5e0] sm:$0xff]
  %v551 = vld [vmem:[#allocation2 + $0x5e8] sm:$0xff]
  %v552 = vld [vmem:[#allocation2 + $0x5f0] sm:$0xff]
  %v553 = vld [vmem:[#allocation2 + $0x5f8] sm:$0xff]
  %554 = vmatprep.subr.mxu0 %v393
  %555 = vmatpush1.msra.mxu0 %v392
  %556 = vmatprep.subr.mxu0 %v391
  %557 = vmatpush1.msra.mxu0 %v390
  %558 = vmatprep.subr.mxu0 %v389
  %559 = vmatpush1.msra.mxu0 %v388
  %560 = vmatprep.subr.mxu0 %v387
  %561 = vmatpush1.msra.mxu0 %v386
  %562 = vmatprep.subr.mxu0 %v385
  %563 = vmatpush1.msra.mxu0 %v384
  %564 = vmatprep.subr.mxu0 %v383
  %565 = vmatpush1.msra.mxu0 %v382
  %566 = vmatprep.subr.mxu0 %v381
  %567 = vmatpush1.msra.mxu0 %v380
  %568 = vmatprep.subr.mxu0 %v379
  %569 = vmatpush1.msra.mxu0 %v378
  %570 = vmatprep.subr.mxu0 %v377
  %571 = vmatpush1.msra.mxu0 %v376
  %572 = vmatprep.subr.mxu0 %v375
  %573 = vmatpush1.msra.mxu0 %v374
  %574 = vmatprep.subr.mxu0 %v373
  %575 = vmatpush1.msra.mxu0 %v372
  %576 = vmatprep.subr.mxu0 %v371
  %577 = vmatpush1.msra.mxu0 %v370
  %578 = vmatprep.subr.mxu0 %v369
  %579 = vmatpush1.msra.mxu0 %v368
  %580 = vmatprep.subr.mxu0 %v367
  %581 = vmatpush1.msra.mxu0 %v366
  %582 = vmatprep.subr.mxu0 %v365
  %583 = vmatpush1.msra.mxu0 %v364
  %584 = vmatprep.subr.mxu0 %v363
  %585 = vmatpush1.msra.mxu0 %v362
  %586 = vmatprep.subr.mxu0 %v425
  %587 = vmatpush2.msra.mxu0 %v424
  %588 = vmatprep.subr.mxu0 %v423
  %589 = vmatpush2.msra.mxu0 %v422
  %590 = vmatprep.subr.mxu0 %v421
  %591 = vmatpush2.msra.mxu0 %v420
  %592 = vmatprep.subr.mxu0 %v419
  %593 = vmatpush2.msra.mxu0 %v418
  %594 = vmatprep.subr.mxu0 %v417
  %595 = vmatpush2.msra.mxu0 %v416
  %596 = vmatprep.subr.mxu0 %v415
  %597 = vmatpush2.msra.mxu0 %v414
  %598 = vmatprep.subr.mxu0 %v413
  %599 = vmatpush2.msra.mxu0 %v412
  %600 = vmatprep.subr.mxu0 %v411
  %601 = vmatpush2.msra.mxu0 %v410
  %602 = vmatprep.subr.mxu0 %v409
  %603 = vmatpush2.msra.mxu0 %v408
  %604 = vmatprep.subr.mxu0 %v407
  %605 = vmatpush2.msra.mxu0 %v406
  %606 = vmatprep.subr.mxu0 %v405
  %607 = vmatpush2.msra.mxu0 %v404
  %608 = vmatprep.subr.mxu0 %v403
  %609 = vmatpush2.msra.mxu0 %v402
  %610 = vmatprep.subr.mxu0 %v401
  %611 = vmatpush2.msra.mxu0 %v400
  %612 = vmatprep.subr.mxu0 %v399
  %613 = vmatpush2.msra.mxu0 %v398
  %614 = vmatprep.subr.mxu0 %v397
  %615 = vmatpush2.msra.mxu0 %v396
  %616 = vmatprep.subr.mxu0 %v395
  %617 = vmatpush2.msra.mxu0 %v394
  %618 = vmatprep.mubr.f32.mxu0 %v219
  %619 = vmatmul.mubr.f32.gmra.mxu0 %v218
  %v620 = vpop.f32.mrf.mxu0
  %v621 = vadd.f32 0.0, %v620
  %v622 = vpop.f32.mrf.mxu0
  %v623 = vadd.f32 0.0, %v622
  %624 = vmatprep.mubr.f32.mxu0 %v355
  %625 = vmatmul.mubr.f32.gmra.mxu0 %v354
  %v626 = vpop.f32.mrf.mxu0
  %v627 = vadd.f32 0.0, %v626
  %v628 = vpop.f32.mrf.mxu0
  %v629 = vadd.f32 0.0, %v628
  %630 = vdwg.mxu0
  %631 = vmatprep.subr.mxu0 %v457
  %632 = vmatpush1.msra.mxu0 %v456
  %633 = vmatprep.subr.mxu0 %v455
  %634 = vmatpush1.msra.mxu0 %v454
  %635 = vmatprep.subr.mxu0 %v453
  %636 = vmatpush1.msra.mxu0 %v452
  %637 = vmatprep.subr.mxu0 %v451
  %638 = vmatpush1.msra.mxu0 %v450
  %639 = vmatprep.subr.mxu0 %v449
  %640 = vmatpush1.msra.mxu0 %v448
  %641 = vmatprep.subr.mxu0 %v447
  %642 = vmatpush1.msra.mxu0 %v446
  %643 = vmatprep.subr.mxu0 %v445
  %644 = vmatpush1.msra.mxu0 %v444
  %645 = vmatprep.subr.mxu0 %v443
  %646 = vmatpush1.msra.mxu0 %v442
  %647 = vmatprep.subr.mxu0 %v441
  %648 = vmatpush1.msra.mxu0 %v440
  %649 = vmatprep.subr.mxu0 %v439
  %650 = vmatpush1.msra.mxu0 %v438
  %651 = vmatprep.subr.mxu0 %v437
  %652 = vmatpush1.msra.mxu0 %v436
  %653 = vmatprep.subr.mxu0 %v435
  %654 = vmatpush1.msra.mxu0 %v434
  %655 = vmatprep.subr.mxu0 %v433
  %656 = vmatpush1.msra.mxu0 %v432
  %657 = vmatprep.subr.mxu0 %v431
  %658 = vmatpush1.msra.mxu0 %v430
  %659 = vmatprep.subr.mxu0 %v429
  %660 = vmatpush1.msra.mxu0 %v428
  %661 = vmatprep.subr.mxu0 %v427
  %662 = vmatpush1.msra.mxu0 %v426
  %663 = vmatprep.subr.mxu0 %v489
  %664 = vmatpush2.msra.mxu0 %v488
  %665 = vmatprep.subr.mxu0 %v487
  %666 = vmatpush2.msra.mxu0 %v486
  %667 = vmatprep.subr.mxu0 %v485
  %668 = vmatpush2.msra.mxu0 %v484
  %669 = vmatprep.subr.mxu0 %v483
  %670 = vmatpush2.msra.mxu0 %v482
  %671 = vmatprep.subr.mxu0 %v481
  %672 = vmatpush2.msra.mxu0 %v480
  %673 = vmatprep.subr.mxu0 %v479
  %674 = vmatpush2.msra.mxu0 %v478
  %675 = vmatprep.subr.mxu0 %v477
  %676 = vmatpush2.msra.mxu0 %v476
  %677 = vmatprep.subr.mxu0 %v475
  %678 = vmatpush2.msra.mxu0 %v474
  %679 = vmatprep.subr.mxu0 %v473
  %680 = vmatpush2.msra.mxu0 %v472
  %681 = vmatprep.subr.mxu0 %v471
  %682 = vmatpush2.msra.mxu0 %v470
  %683 = vmatprep.subr.mxu0 %v469
  %684 = vmatpush2.msra.mxu0 %v468
  %685 = vmatprep.subr.mxu0 %v467
  %686 = vmatpush2.msra.mxu0 %v466
  %687 = vmatprep.subr.mxu0 %v465
  %688 = vmatpush2.msra.mxu0 %v464
  %689 = vmatprep.subr.mxu0 %v463
  %690 = vmatpush2.msra.mxu0 %v462
  %691 = vmatprep.subr.mxu0 %v461
  %692 = vmatpush2.msra.mxu0 %v460
  %693 = vmatprep.subr.mxu0 %v459
  %694 = vmatpush2.msra.mxu0 %v458
  %695 = vmatprep.mubr.f32.mxu0 %v221
  %696 = vmatmul.mubr.f32.gmra.mxu0 %v220
  %v697 = vpop.f32.mrf.mxu0
  %v698 = vadd.f32 %v621, %v697
  %v699 = vpop.f32.mrf.mxu0
  %v700 = vadd.f32 %v623, %v699
  %701 = vmatprep.mubr.f32.mxu0 %v357
  %702 = vmatmul.mubr.f32.gmra.mxu0 %v356
  %v703 = vpop.f32.mrf.mxu0
  %v704 = vadd.f32 %v627, %v703
  %v705 = vpop.f32.mrf.mxu0
  %v706 = vadd.f32 %v629, %v705
  %707 = vdwg.mxu0
  %708 = vmatprep.subr.mxu0 %v521
  %709 = vmatpush1.msra.mxu0 %v520
  %710 = vmatprep.subr.mxu0 %v519
  %711 = vmatpush1.msra.mxu0 %v518
  %712 = vmatprep.subr.mxu0 %v517
  %713 = vmatpush1.msra.mxu0 %v516
  %714 = vmatprep.subr.mxu0 %v515
  %715 = vmatpush1.msra.mxu0 %v514
  %716 = vmatprep.subr.mxu0 %v513
  %717 = vmatpush1.msra.mxu0 %v512
  %718 = vmatprep.subr.mxu0 %v511
  %719 = vmatpush1.msra.mxu0 %v510
  %720 = vmatprep.subr.mxu0 %v509
  %721 = vmatpush1.msra.mxu0 %v508
  %722 = vmatprep.subr.mxu0 %v507
  %723 = vmatpush1.msra.mxu0 %v506
  %724 = vmatprep.subr.mxu0 %v505
  %725 = vmatpush1.msra.mxu0 %v504
  %726 = vmatprep.subr.mxu0 %v503
  %727 = vmatpush1.msra.mxu0 %v502
  %728 = vmatprep.subr.mxu0 %v501
  %729 = vmatpush1.msra.mxu0 %v500
  %730 = vmatprep.subr.mxu0 %v499
  %731 = vmatpush1.msra.mxu0 %v498
  %732 = vmatprep.subr.mxu0 %v497
  %733 = vmatpush1.msra.mxu0 %v496
  %734 = vmatprep.subr.mxu0 %v495
  %735 = vmatpush1.msra.mxu0 %v494
  %736 = vmatprep.subr.mxu0 %v493
  %737 = vmatpush1.msra.mxu0 %v492
  %738 = vmatprep.subr.mxu0 %v491
  %739 = vmatpush1.msra.mxu0 %v490
  %740 = vmatprep.subr.mxu0 %v553
  %741 = vmatpush2.msra.mxu0 %v552
  %742 = vmatprep.subr.mxu0 %v551
  %743 = vmatpush2.msra.mxu0 %v550
  %744 = vmatprep.subr.mxu0 %v549
  %745 = vmatpush2.msra.mxu0 %v548
  %746 = vmatprep.subr.mxu0 %v547
  %747 = vmatpush2.msra.mxu0 %v546
  %748 = vmatprep.subr.mxu0 %v545
  %749 = vmatpush2.msra.mxu0 %v544
  %750 = vmatprep.subr.mxu0 %v543
  %751 = vmatpush2.msra.mxu0 %v542
  %752 = vmatprep.subr.mxu0 %v541
  %753 = vmatpush2.msra.mxu0 %v540
  %754 = vmatprep.subr.mxu0 %v539
  %755 = vmatpush2.msra.mxu0 %v538
  %756 = vmatprep.subr.mxu0 %v537
  %757 = vmatpush2.msra.mxu0 %v536
  %758 = vmatprep.subr.mxu0 %v535
  %759 = vmatpush2.msra.mxu0 %v534
  %760 = vmatprep.subr.mxu0 %v533
  %761 = vmatpush2.msra.mxu0 %v532
  %762 = vmatprep.subr.mxu0 %v531
  %763 = vmatpush2.msra.mxu0 %v530
  %764 = vmatprep.subr.mxu0 %v529
  %765 = vmatpush2.msra.mxu0 %v528
  %766 = vmatprep.subr.mxu0 %v527
  %767 = vmatpush2.msra.mxu0 %v526
  %768 = vmatprep.subr.mxu0 %v525
  %769 = vmatpush2.msra.mxu0 %v524
  %770 = vmatprep.subr.mxu0 %v523
  %771 = vmatpush2.msra.mxu0 %v522
  %772 = vmatprep.mubr.f32.mxu0 %v223
  %773 = vmatmul.mubr.f32.gmra.mxu0 %v222
  %v774 = vpop.f32.mrf.mxu0
  %v775 = vadd.f32 %v698, %v774
  %v776 = vpop.f32.mrf.mxu0
  %v777 = vadd.f32 %v700, %v776
  %778 = vmatprep.mubr.f32.mxu0 0.0
  %779 = vmatmul.mubr.f32.gmra.mxu0 0.0
  %v780 = vpop.f32.mrf.mxu0
  %v781 = vadd.f32 %v704, %v780
  %v782 = vpop.f32.mrf.mxu0
  %v783 = vadd.f32 %v706, %v782
  %784 = vdwg.mxu0
  %785 = vst [vmem:[%s4] sm:$0xff] %v775
  %786 = vst [vmem:[%s4 + $0x8] sm:$0xff] %v777
  %787 = vst [vmem:[%s4 + $0x10] sm:$0xff] %v781
  %788 = vst [vmem:[%s4 + $0x18] sm:$0xff] %v783
  // Predicated region
  $region18: #{custom_clip_coop_forward.1} parent=0 // pred_check
    _
  $region19: #{custom_clip_coop_forward.1} parent=0 // pred_check_branch
    %790 = sbr.rel (0) target = $region21
  $region20: #{custom_clip_coop_forward.1} parent=0 // pred_region
    _
  $region21: #{custom_clip_coop_forward.1} parent=0 // pred_fallthru
    _
  // Predicated region
  $region22: #{custom_clip_coop_forward.1} parent=0 // pred_check
    _
  $region23: #{custom_clip_coop_forward.1} parent=0 // pred_check_branch
    %792 = sbr.rel (0) target = $region25
  $region24: #{custom_clip_coop_forward.1} parent=0 // pred_region
    _
  $region25: #{custom_clip_coop_forward.1} parent=0 // pred_fallthru
    _
  %793 = vsyncmov [#allocation3]
  %s794 = vpop.sfrf %793
  %p795 = scmp.eq.s32.totalorder %s794, 0
  %p796 = pneg %p795
  %798 = shalt.err (%p796)

</llo_original>
